<compile_context>
chip_gen: v7x
topology: tpu7x:2x2x1
jax: 0.10.0
libtpu: 0.0.40
codegen_flags: <defaults>
</compile_context>

<pallas_src>
import functools

import jax
import jax.numpy as jnp
from jax.experimental import pallas as pl
from jax.experimental.pallas import tpu as pltpu

_LANE = 128
_SUBLANE = 8


def _chip_config():
    """Return (ncores, max_rows_per_block) for the local TPU generation."""
    try:
        kind = jax.devices()[0].device_kind.lower()
    except Exception:
        kind = ""
    if "v7" in kind or "tpu7" in kind:
        # v7x: 2 TensorCores/chip, 64 MiB VMEM -> 8192-row tiles (4 MiB f32/blk,
        # 16 MiB live double-buffered) keeps per-step overhead amortized.
        return 2, 8192
    # v5e / v6e: single TensorCore; 4096-row tiles (2 MiB f32/blk).
    return 1, 4096


def _iou_loss_ref(outputs, targets, eps=1e-7, threshold=None):
    """Pure-XLA reference (also the tiny-input fast path)."""
    o = outputs.astype(jnp.float32)
    t = targets.astype(jnp.float32)
    if threshold is not None:
        o = (o > threshold).astype(jnp.float32)
    intersection = jnp.sum(o * t)
    union = jnp.sum(o) + jnp.sum(t)
    iou = (intersection + eps * (union == 0.0)) / (union - intersection + eps)
    return 1.0 - iou


def _iou_kernel(o_ref, t_ref, out_ref, acc_i, acc_s, *,
                threshold, tm, bpc, blocks_total, rem_last, needs_mask,
                two_core):
    """Grid: (bpc,) on single-TC chips, (2, bpc) with CORE_PARALLEL on v7x."""
    if two_core:
        c = pl.program_id(0)
        j = pl.program_id(1)
        b = c * bpc + j          # logical block index
    else:
        j = pl.program_id(0)
        b = j

    @pl.when(j == 0)
    def _init():
        acc_i[...] = jnp.zeros_like(acc_i)
        acc_s[...] = jnp.zeros_like(acc_s)

    def accumulate(mask_tail):
        o = o_ref[...]
        t = t_ref[...].astype(jnp.float32)
        if threshold is not None:
            # Binarize in the native dtype; cast the boolean once.
            o = (o > threshold).astype(jnp.float32)
        else:
            o = o.astype(jnp.float32)
        if mask_tail:
            # Only the last real block runs this path.  `rem_last` is a static
            # Python int, so no traced global-index arithmetic (no i32 overflow).
            row = jax.lax.broadcasted_iota(jnp.int32, (tm, _LANE), 0)
            lane = jax.lax.broadcasted_iota(jnp.int32, (tm, _LANE), 1)
            valid = (row * _LANE + lane) < rem_last
            o = jnp.where(valid, o, 0.0)
            t = jnp.where(valid, t, 0.0)
        prod = o * t         # elementwise intersection term
        ssum = o + t         # fused sum(o) + sum(t)
        if tm > _SUBLANE:
            # Reduce the tile to one (8,128) vreg with pure VALU adds (no XLU,
            # no full-tile accumulator RMW).
            prod = prod.reshape(tm // _SUBLANE, _SUBLANE, _LANE).sum(axis=0)
            ssum = ssum.reshape(tm // _SUBLANE, _SUBLANE, _LANE).sum(axis=0)
        acc_i[...] += prod
        acc_s[...] += ssum

    if needs_mask:
        @pl.when(b < blocks_total - 1)
        def _steady():
            accumulate(False)

        @pl.when(b == blocks_total - 1)
        def _tail():
            accumulate(True)
        # b > blocks_total - 1 (clamped duplicate block on the 2nd core, v7x
        # only): contributes nothing -> neither branch fires.
    else:
        accumulate(False)

    @pl.when(j == bpc - 1)
    def _finalize():
        # Emit the per-core (8,128) partials; the trivial final reduce happens
        # in XLA (lane-dense stores, no in-kernel cross-lane reduction needed).
        out_ref[0, 0] = acc_i[...]
        out_ref[0, 1] = acc_s[...]


def iou_loss(outputs, targets, eps: float = 1e-7, threshold=None,
             min_pallas_elems: int = 65536):
    """Pallas implementation of IoULoss.forward (returns a scalar)."""
    o = outputs.reshape(-1)
    t = targets.reshape(-1)
    n_true = o.shape[0]

    # Tiny-input fast path: pallas_call fixed overhead dominates below ~64K.
    if n_true < min_pallas_elems:
        return _iou_loss_ref(outputs, targets, eps=eps, threshold=threshold)

    ncores, tm_max = _chip_config()

    # Lane-dense layout; pad rows to a multiple of 8 sublanes so the in-kernel
    # (tm//8, 8, 128) reduction is always legal.  Pad values never matter: the
    # last real block is masked against rem_last inside the kernel.
    pad = (-n_true) % (_SUBLANE * _LANE)
    if pad:
        o = jnp.pad(o, (0, pad))
        t = jnp.pad(t, (0, pad))
    m = o.shape[0] // _LANE
    o2 = o.reshape(m, _LANE)   # stored dtype preserved (bf16 stays bf16)
    t2 = t.reshape(m, _LANE)

    tm = min(m, tm_max)                       # multiple of 8 by construction
    blocks_total = pl.cdiv(m, tm)
    bpc = pl.cdiv(blocks_total, ncores)       # blocks per core
    needs_mask = (ncores * bpc * tm * _LANE) != n_true
    rem_last = n_true - (blocks_total - 1) * tm * _LANE   # static Python int

    kernel = functools.partial(
        _iou_kernel, threshold=threshold, tm=tm, bpc=bpc,
        blocks_total=blocks_total, rem_last=rem_last,
        needs_mask=needs_mask, two_core=(ncores == 2))

    if ncores == 2:
        grid = (ncores, bpc)
        in_map = lambda c, j: (jnp.minimum(c * bpc + j, blocks_total - 1), 0)
        out_map = lambda c, j: (c, 0, 0, 0)
        dim_sem = (pltpu.CORE_PARALLEL, pltpu.ARBITRARY)
    else:
        grid = (bpc,)
        in_map = lambda j: (j, 0)
        out_map = lambda j: (0, 0, 0, 0)
        dim_sem = ("arbitrary",)

    # Explicit VMEM budget: 2 inputs x double buffer x block + slack for the
    # (8,128) accumulators, output blocks and internal scratch.
    vmem_bytes = 2 * tm * _LANE * (o2.dtype.itemsize + t2.dtype.itemsize) + (4 << 20)

    partials = pl.pallas_call(
        kernel,
        out_shape=jax.ShapeDtypeStruct((ncores, 2, _SUBLANE, _LANE), jnp.float32),
        grid_spec=pltpu.PrefetchScalarGridSpec(
            num_scalar_prefetch=0,
            grid=grid,
            in_specs=[
                pl.BlockSpec((tm, _LANE), in_map),
                pl.BlockSpec((tm, _LANE), in_map),
            ],
            out_specs=pl.BlockSpec((1, 2, _SUBLANE, _LANE), out_map),
            scratch_shapes=[
                pltpu.VMEM((_SUBLANE, _LANE), jnp.float32),  # intersection acc
                pltpu.VMEM((_SUBLANE, _LANE), jnp.float32),  # sum acc
            ],
        ),
        compiler_params=pltpu.CompilerParams(
            dimension_semantics=dim_sem,
            vmem_limit_bytes=int(vmem_bytes)),
    )(o2, t2)

    # Final tiny reduction + scalar math in XLA.
    inter = jnp.sum(partials[:, 0])
    union = jnp.sum(partials[:, 1])
    iou = (inter + eps * (union == 0.0).astype(jnp.float32)) / (
        union - inter + eps)
    return 1.0 - iou


if __name__ == "__main__":
    key = jax.random.PRNGKey(0)
    k_out, k_tgt = jax.random.split(key)

    # 1) NCHW f32, lane-aligned, no threshold — force the Pallas path.
    outputs = jax.nn.sigmoid(
        jax.random.normal(k_out, (2, 4, 16, 16), dtype=jnp.float32))
    targets = (jax.random.uniform(k_tgt, (2, 4, 16, 16)) > 0.5).astype(jnp.float32)
    loss = jax.block_until_ready(iou_loss(outputs, targets, min_pallas_elems=0))
    ref = jax.block_until_ready(_iou_loss_ref(outputs, targets))
    assert jnp.allclose(loss, ref, rtol=1e-5, atol=1e-5), (loss, ref)

    # 2) Unaligned shape + threshold — exercises row pad + last-block mask.
    out2 = jax.nn.sigmoid(
        jax.random.normal(k_out, (2, 3, 7, 5), dtype=jnp.float32))
    tgt2 = (jax.random.uniform(k_tgt, (2, 3, 7, 5)) > 0.5).astype(jnp.float32)
    loss2 = jax.block_until_ready(
        iou_loss(out2, tgt2, threshold=0.5, min_pallas_elems=0))
    ref2 = jax.block_until_ready(_iou_loss_ref(out2, tgt2, threshold=0.5))
    assert jnp.allclose(loss2, ref2, rtol=1e-5, atol=1e-5), (loss2, ref2)

    # 3) bf16 inputs stay bf16 in HBM (half the bytes moved); in-kernel upcast.
    out3 = outputs.astype(jnp.bfloat16)
    tgt3 = targets.astype(jnp.bfloat16)
    loss3 = jax.block_until_ready(iou_loss(out3, tgt3, min_pallas_elems=0))
    ref3 = jax.block_until_ready(_iou_loss_ref(out3, tgt3))
    assert jnp.allclose(loss3, ref3, rtol=1e-4, atol=1e-4), (loss3, ref3)

    # 4) Default tiny-input fast path (pure XLA) sanity check.
    loss4 = jax.block_until_ready(iou_loss(outputs, targets))
    assert jnp.allclose(loss4, ref, rtol=1e-5, atol=1e-5), (loss4, ref)

    print("KERNEL_OK")
</pallas_src>

<mosaic_0001>
module attributes {stable_mosaic.version = 11 : i64} {
  func.func @_iou_kernel(%arg0: i32, %arg1: memref<16x128xf32, #tpu.memory_space<vmem>>, %arg2: memref<16x128xf32, #tpu.memory_space<vmem>>, %arg3: memref<1x2x8x128xf32, #tpu.memory_space<vmem>>, %arg4: memref<8x128xf32, #tpu.memory_space<vmem>>, %arg5: memref<8x128xf32, #tpu.memory_space<vmem>>) attributes {dimension_semantics = [#tpu.dimension_semantics<arbitrary>], iteration_bounds = array<i64: 1>, scalar_prefetch = 0 : i64, scratch_operands = 2 : i64, tpu.core_type = #tpu.core_type<tc>, window_params = [{transform_indices = @transform_0, window_bounds = array<i64: 16, 128>}, {transform_indices = @transform_1, window_bounds = array<i64: 16, 128>}, {pipeline_mode = #tpu.pipeline_mode<synchronous>, transform_indices = @transform_2, window_bounds = array<i64: 1, 2, 8, 128>}]} {
    %c0_i32 = arith.constant 0 : i32
    %0 = arith.cmpi eq, %arg0, %c0_i32 : i32
    %1 = arith.extui %0 : i1 to i32
    %c0_i32_0 = arith.constant 0 : i32
    %2 = arith.cmpi ne, %1, %c0_i32_0 : i32
    scf.if %2 {
      %cst_15 = arith.constant 0.000000e+00 : f32
      %20 = vector.broadcast %cst_15 : f32 to vector<8x128xf32>
      %c0_16 = arith.constant 0 : index
      %c0_17 = arith.constant 0 : index
      %21 = vector.load %arg4[%c0_16, %c0_17] : memref<8x128xf32, #tpu.memory_space<vmem>>, vector<8x128xf32>
      tpu.vector_store %arg4[%c0_16, %c0_17], %20 {strides = array<i32>} : memref<8x128xf32, #tpu.memory_space<vmem>>, vector<8x128xf32>,
      %cst_18 = arith.constant 0.000000e+00 : f32
      %22 = vector.broadcast %cst_18 : f32 to vector<8x128xf32>
      %c0_19 = arith.constant 0 : index
      %c0_20 = arith.constant 0 : index
      %23 = vector.load %arg5[%c0_19, %c0_20] : memref<8x128xf32, #tpu.memory_space<vmem>>, vector<8x128xf32>
      tpu.vector_store %arg5[%c0_19, %c0_20], %22 {strides = array<i32>} : memref<8x128xf32, #tpu.memory_space<vmem>>, vector<8x128xf32>,
    } else {
    }
    %c0 = arith.constant 0 : index
    %c0_1 = arith.constant 0 : index
    %3 = vector.load %arg1[%c0, %c0_1] : memref<16x128xf32, #tpu.memory_space<vmem>>, vector<16x128xf32>
    %c0_2 = arith.constant 0 : index
    %c0_3 = arith.constant 0 : index
    %4 = vector.load %arg2[%c0_2, %c0_3] : memref<16x128xf32, #tpu.memory_space<vmem>>, vector<16x128xf32>
    %5 = arith.mulf %3, %4 : vector<16x128xf32>
    %6 = arith.addf %3, %4 : vector<16x128xf32>
    %7 = vector.shape_cast %5 : vector<16x128xf32> to vector<2x8x128xf32>
    %cst = arith.constant dense<0.000000e+00> : vector<8x128xf32>
    %8 = vector.multi_reduction <add>, %7, %cst [0] : vector<2x8x128xf32> to vector<8x128xf32>
    %9 = vector.shape_cast %6 : vector<16x128xf32> to vector<2x8x128xf32>
    %cst_4 = arith.constant dense<0.000000e+00> : vector<8x128xf32>
    %10 = vector.multi_reduction <add>, %9, %cst_4 [0] : vector<2x8x128xf32> to vector<8x128xf32>
    %c0_5 = arith.constant 0 : index
    %c0_6 = arith.constant 0 : index
    %11 = vector.load %arg4[%c0_5, %c0_6] : memref<8x128xf32, #tpu.memory_space<vmem>>, vector<8x128xf32>
    %12 = arith.addf %11, %8 : vector<8x128xf32>
    %c0_7 = arith.constant 0 : index
    %c0_8 = arith.constant 0 : index
    %13 = vector.load %arg4[%c0_7, %c0_8] : memref<8x128xf32, #tpu.memory_space<vmem>>, vector<8x128xf32>
    tpu.vector_store %arg4[%c0_7, %c0_8], %12 {strides = array<i32>} : memref<8x128xf32, #tpu.memory_space<vmem>>, vector<8x128xf32>,
    %c0_9 = arith.constant 0 : index
    %c0_10 = arith.constant 0 : index
    %14 = vector.load %arg5[%c0_9, %c0_10] : memref<8x128xf32, #tpu.memory_space<vmem>>, vector<8x128xf32>
    %15 = arith.addf %14, %10 : vector<8x128xf32>
    %c0_11 = arith.constant 0 : index
    %c0_12 = arith.constant 0 : index
    %16 = vector.load %arg5[%c0_11, %c0_12] : memref<8x128xf32, #tpu.memory_space<vmem>>, vector<8x128xf32>
    tpu.vector_store %arg5[%c0_11, %c0_12], %15 {strides = array<i32>} : memref<8x128xf32, #tpu.memory_space<vmem>>, vector<8x128xf32>,
    %c0_i32_13 = arith.constant 0 : i32
    %17 = arith.cmpi eq, %arg0, %c0_i32_13 : i32
    %18 = arith.extui %17 : i1 to i32
    %c0_i32_14 = arith.constant 0 : i32
    %19 = arith.cmpi ne, %18, %c0_i32_14 : i32
    scf.if %19 {
      %c0_15 = arith.constant 0 : index
      %c0_16 = arith.constant 0 : index
      %20 = vector.load %arg4[%c0_15, %c0_16] : memref<8x128xf32, #tpu.memory_space<vmem>>, vector<8x128xf32>
      %c0_17 = arith.constant 0 : index
      %c0_18 = arith.constant 0 : index
      %c0_19 = arith.constant 0 : index
      %c0_20 = arith.constant 0 : index
      %21 = vector.load %arg3[%c0_17, %c0_18, %c0_19, %c0_20] : memref<1x2x8x128xf32, #tpu.memory_space<vmem>>, vector<1x1x8x128xf32>
      %22 = vector.shape_cast %21 : vector<1x1x8x128xf32> to vector<8x128xf32>
      %23 = vector.shape_cast %20 : vector<8x128xf32> to vector<1x1x8x128xf32>
      tpu.vector_store %arg3[%c0_17, %c0_18, %c0_19, %c0_20], %23 {strides = array<i32>} : memref<1x2x8x128xf32, #tpu.memory_space<vmem>>, vector<1x1x8x128xf32>,
      %c0_21 = arith.constant 0 : index
      %c0_22 = arith.constant 0 : index
      %24 = vector.load %arg5[%c0_21, %c0_22] : memref<8x128xf32, #tpu.memory_space<vmem>>, vector<8x128xf32>
      %c0_23 = arith.constant 0 : index
      %c1 = arith.constant 1 : index
      %c0_24 = arith.constant 0 : index
      %c0_25 = arith.constant 0 : index
      %25 = vector.load %arg3[%c0_23, %c1, %c0_24, %c0_25] : memref<1x2x8x128xf32, #tpu.memory_space<vmem>>, vector<1x1x8x128xf32>
      %26 = vector.shape_cast %25 : vector<1x1x8x128xf32> to vector<8x128xf32>
      %27 = vector.shape_cast %24 : vector<8x128xf32> to vector<1x1x8x128xf32>
      tpu.vector_store %arg3[%c0_23, %c1, %c0_24, %c0_25], %27 {strides = array<i32>} : memref<1x2x8x128xf32, #tpu.memory_space<vmem>>, vector<1x1x8x128xf32>,
    } else {
    }
    return
  }
  func.func @transform_0(%arg0: i32) -> (i32, i32) {
    %c0_i32 = arith.constant 0 : i32
    %c0_i32_0 = arith.constant 0 : i32
    return %arg0, %c0_i32 : i32, i32
  }
  func.func @transform_1(%arg0: i32) -> (i32, i32) {
    %c0_i32 = arith.constant 0 : i32
    %c0_i32_0 = arith.constant 0 : i32
    return %arg0, %c0_i32 : i32, i32
  }
  func.func @transform_2(%arg0: i32) -> (i32, i32, i32, i32) {
    %c0_i32 = arith.constant 0 : i32
    %c0_i32_0 = arith.constant 0 : i32
    %c0_i32_1 = arith.constant 0 : i32
    %c0_i32_2 = arith.constant 0 : i32
    %c0_i32_3 = arith.constant 0 : i32
    return %c0_i32, %c0_i32_0, %c0_i32_1, %c0_i32_2 : i32, i32, i32, i32
  }
}

</mosaic_0001>

<llo_original>
// kernel: tpu_custom_call.1
$region0: #{tpu_custom_call.1}
  #allocation0 [shape = 'u32[]', space=smem, size = 0x4, offset = 0x4, fixed_abs, tag = 'smem constant byte address 0x4 - core index']
  #allocation1 [shape = 'u32[144,128]{1,0:T(1,128)}', space=vmem, size = 0x12000, scoped, tag = 'internal scratch']
  #allocation2 [shape = 'f32[8,128]{1,0:T(8,128)}', space=vmem, size = 0x1000, scoped, tag = 'scratch operand']
  #allocation3 [shape = 'f32[8,128]{1,0:T(8,128)}', space=vmem, size = 0x1000, scoped, tag = 'scratch operand']
  %s0 = inlined_call_operand.hbm [shape: f32[16,128], index: 0, kind: input, shape index: {}]
  %s1 = inlined_call_operand.hbm [shape: f32[16,128], index: 1, kind: input, shape index: {}]
  %s2 = inlined_call_operand.hbm [shape: f32[1,2,8,128], index: 2, kind: output, shape index: {}]
  %s3 = sld [smem:[#allocation0]]
  $region34: #{tpu_custom_call.1} parent=0
    _
  %s5 = ssub.s32 1, %s3
  %s6 = scalar_select 0, %s5, %s3
  $region1: #{tpu_custom_call.1} parent=0
    #allocation4 [shape = 'u8[8192]{0}', space=vmem, size = 0x2000, scoped, tag = 'input window, operand 0, single buffered']
    #allocation5 [shape = 's32[1]{0}', space=sflag, size = 0x4, scoped, tag = 'scoped memory for tpu_custom_call.1']
    #allocation6 [shape = 's32[1]{0}', space=sflag, size = 0x4, scoped, tag = 'scoped memory for tpu_custom_call.1']
    #allocation7 [shape = 'u8[8192]{0}', space=vmem, size = 0x2000, scoped, tag = 'input window, operand 1, single buffered']
    #allocation8 [shape = 's32[1]{0}', space=sflag, size = 0x4, scoped, tag = 'scoped memory for tpu_custom_call.1']
    #allocation9 [shape = 'u8[8192]{0}', space=vmem, size = 0x2000, scoped, tag = 'output window, operand 0, single buffered']
    %7 = vsyncpa [#allocation5], 0
    %8 = vsyncpa [#allocation8], 0
    %9 = vsyncpa [#allocation6], 0
    // Predicated region
    $region2: #{tpu_custom_call.1} parent=1 // pred_check
      _
    $region3: #{tpu_custom_call.1} parent=1 // pred_check_branch
      %11 = sbr.rel (0) target = $region5
    $region4: #{tpu_custom_call.1} parent=1 // pred_region
      %s13 = ssub.s32 256, 256
      %14 = vsyncadd [#allocation5], %s13
      %s15 = sshll.u32 [#allocation4], 4
      %s16 = int_to_ptr.vmem [resolvable:$true] %s15
      %21 = dma.hbm_to_vmem [thread:$0]  %s0, 256, %s16, [#allocation5], 128, 128, 8
    $region5: #{tpu_custom_call.1} parent=1 // pred_fallthru
      _
    // Predicated region
    $region6: #{tpu_custom_call.1} parent=1 // pred_check
      _
    $region7: #{tpu_custom_call.1} parent=1 // pred_check_branch
      %23 = sbr.rel (0) target = $region9
    $region8: #{tpu_custom_call.1} parent=1 // pred_region
      %s25 = ssub.s32 256, 256
      %26 = vsyncadd [#allocation8], %s25
      %s27 = sshll.u32 [#allocation7], 4
      %s28 = int_to_ptr.vmem [resolvable:$true] %s27
      %33 = dma.hbm_to_vmem [thread:$0]  %s1, 256, %s28, [#allocation8], 128, 128, 8
    $region9: #{tpu_custom_call.1} parent=1 // pred_fallthru
      _
    // Predicated region
    $region10: #{tpu_custom_call.1} parent=1 // pred_check
      _
    $region11: #{tpu_custom_call.1} parent=1 // pred_check_branch
      %35 = sbr.rel (0) target = $region13
    $region12: #{tpu_custom_call.1} parent=1 // pred_region
      %36 = dma.done [#allocation5], 256
    $region13: #{tpu_custom_call.1} parent=1 // pred_fallthru
      _
    // Predicated region
    $region14: #{tpu_custom_call.1} parent=1 // pred_check
      _
    $region15: #{tpu_custom_call.1} parent=1 // pred_check_branch
      %38 = sbr.rel (0) target = $region17
    $region16: #{tpu_custom_call.1} parent=1 // pred_region
      %39 = dma.done [#allocation8], 256
    $region17: #{tpu_custom_call.1} parent=1 // pred_fallthru
      _
    %p40 = scmp.eq.s32.totalorder 0, 0
    // Predicated region
    $region18: #{tpu_custom_call.1} parent=1 // pred_check
      %p41 = pneg %p40
    $region19: #{tpu_custom_call.1} parent=1 // pred_check_branch
      %43 = sbr.rel (%p41) target = $region21
    $region20: #{tpu_custom_call.1} parent=1 // pred_region
      %44 = vst [vmem:[#allocation2] sm:$0xff] 0.0
      %45 = vst [vmem:[#allocation3] sm:$0xff] 0.0
    $region21: #{tpu_custom_call.1} parent=1 // pred_fallthru
      _
    %v46 = vld [vmem:[#allocation4] sm:$0xff]
    %v47 = vld [vmem:[#allocation4 + $0x8] sm:$0xff]
    %v48 = vld [vmem:[#allocation7] sm:$0xff]
    %v49 = vld [vmem:[#allocation7 + $0x8] sm:$0xff]
    %v50 = vmul.f32 %v46, %v48
    %v51 = vmul.f32 %v47, %v49
    %v52 = vadd.f32 %v46, %v48
    %v53 = vadd.f32 %v47, %v49
    %v54 = vadd.f32 %v50, %v51
    %v55 = vadd.f32 %v52, %v53
    %v56 = vld [vmem:[#allocation2] sm:$0xff]
    %v57 = vadd.f32 %v56, %v54
    %58 = vst [vmem:[#allocation2] sm:$0xff] %v57
    %v59 = vld [vmem:[#allocation3] sm:$0xff]
    %v60 = vadd.f32 %v59, %v55
    %61 = vst [vmem:[#allocation3] sm:$0xff] %v60
    // Predicated region
    $region22: #{tpu_custom_call.1} parent=1 // pred_check
      %p62 = pneg %p40
    $region23: #{tpu_custom_call.1} parent=1 // pred_check_branch
      %64 = sbr.rel (%p62) target = $region25
    $region24: #{tpu_custom_call.1} parent=1 // pred_region
      %v65 = vld [vmem:[#allocation2] sm:$0xff]
      %66 = vst [vmem:[#allocation9] sm:$0xff] %v65
      %v67 = vld [vmem:[#allocation3] sm:$0xff]
      %s68 = scalar_lea.vmem [#allocation9], 8
      %69 = vst [vmem:[%s68] sm:$0xff] %v67
    $region25: #{tpu_custom_call.1} parent=1 // pred_fallthru
      _
    // Predicated region
    $region26: #{tpu_custom_call.1} parent=1 // pred_check
      _
    $region27: #{tpu_custom_call.1} parent=1 // pred_check_branch
      %71 = sbr.rel (0) target = $region29
    $region28: #{tpu_custom_call.1} parent=1 // pred_region
      %s73 = ssub.s32 256, 256
      %74 = vsyncadd [#allocation6], %s73
      %s75 = sshll.u32 [#allocation9], 4
      %s76 = int_to_ptr.vmem [resolvable:$true] %s75
      %81 = dma.vmem_to_hbm [thread:$0]  %s76, 256, %s2, [#allocation6], 128, 128, 8
    $region29: #{tpu_custom_call.1} parent=1 // pred_fallthru
      _
    // Predicated region
    $region30: #{tpu_custom_call.1} parent=1 // pred_check
      _
    $region31: #{tpu_custom_call.1} parent=1 // pred_check_branch
      %83 = sbr.rel (0) target = $region33
    $region32: #{tpu_custom_call.1} parent=1 // pred_region
      %84 = dma.done [#allocation6], 256
    $region33: #{tpu_custom_call.1} parent=1 // pred_fallthru
      _
    %85 = vsyncpa [#allocation5], 1
    %86 = vsyncpa [#allocation8], 1
    %87 = vsyncpa [#allocation6], 1

</llo_original>
